<compile_context>
chip_gen: v7x
topology: tpu7x:2x2x1
jax: 0.10.0
libtpu: 0.0.40
codegen_flags: <defaults>
</compile_context>

<pallas_src>
import math

import jax
import jax.numpy as jnp
from jax import lax
from jax.experimental import pallas as pl
from jax.experimental.pallas import tpu as pltpu


def _pos_emb_kernel(x_ref, w_ref, phase_ref, out_ref):
    # x_ref:     (TR, k)     f32   k packed token values per output row
    # w_ref:     (k, k*C)    f32   w[i, l] = freqs[(l % C) % (C//2)] if l//C == i else 0
    # phase_ref: (1, k*C)    f32   pi/2 on cos lanes, 0 on sin lanes
    # out_ref:   (TR, k*C)
    k = w_ref.shape[0]
    if k == 1:
        # (TR,1) * (1,C) broadcast multiply: one VPU op per element.
        t = x_ref[...] * w_ref[...]
    else:
        # Lane expansion on the idle MXU.  HIGHEST precision (multi-pass)
        # keeps t at ~f32 accuracy, which large timesteps need, on every
        # generation including v7x's bf16/fp8-only MXU.
        t = jnp.dot(x_ref[...], w_ref[...],
                    preferred_element_type=jnp.float32,
                    precision=lax.Precision.HIGHEST)
    # cos(t) == sin(t + pi/2): one transcendental per output element, one
    # lane-dense full-block store, no concatenate.  (Error ~|t| * 2^-24; see
    # module docstring.)
    out_ref[...] = jnp.sin(t + phase_ref[...]).astype(out_ref.dtype)


def make_freqs(num_channels, max_positions=10000, endpoint=False):
    half = num_channels // 2
    denom = max(half - (1 if endpoint else 0), 1)   # guard C==2 with endpoint=True
    e = jnp.arange(half, dtype=jnp.float32) / jnp.float32(denom)
    return (1.0 / max_positions) ** e               # (half,)


def positional_embedding(x, num_channels, max_positions=10000, endpoint=False,
                         *, tile_rows=8192, out_dtype=jnp.float32):
    """x: (I, J) float -> (I, J, num_channels). out_dtype=jnp.bfloat16 halves HBM writeback."""
    I, J = x.shape
    C = int(num_channels)
    assert C >= 2 and C % 2 == 0, "num_channels must be even"
    half = C // 2
    N = I * J
    assert N > 0

    # --- token packing: k tokens per output row so the lane dim is a
    # multiple of 128 (unmasked stores).  Generalized via lcm, capped at 32.
    k = 1
    k_cand = math.lcm(C, 128) // C
    if 1 < k_cand <= 32 and N % k_cand == 0:
        k = k_cand
    rows = N // k
    lanes = k * C

    # --- resident per-lane tables (built once, constant index_map in VMEM).
    freqs = make_freqs(C, max_positions, endpoint)                      # (half,)
    ch = jnp.arange(C)
    freqs_tok = freqs[ch % half]                                        # (C,)
    phase_tok = jnp.where(ch < half, jnp.float32(jnp.pi / 2.0),
                          jnp.float32(0.0))                             # (C,)
    lane = jnp.arange(lanes)
    sel = (lane // C)[None, :] == jnp.arange(k)[:, None]                # (k, lanes)
    w = jnp.where(sel, jnp.tile(freqs_tok, k)[None, :],
                  jnp.float32(0.0)).astype(jnp.float32)                 # (k, lanes)
    phase = jnp.tile(phase_tok, k).reshape(1, lanes).astype(jnp.float32)

    x2d = x.reshape(rows, k).astype(jnp.float32)                        # free reshape

    # --- tile sizing.  VMEM accounting uses the *lane-padded* block sizes:
    # the (tr, k) input block occupies tr*512 B in VMEM (padded to 128 lanes),
    # same order as the output block, not tr*k*4.
    in_row_bytes = 128 * 4                       # (tr, k) padded to 128 lanes
    out_row_bytes = max(lanes, 128) * 4
    budget = 12 * 1024 * 1024                    # double-buffered in + out
    tr_cap = budget // (2 * (in_row_bytes + out_row_bytes))
    tr_cap = max(8, (tr_cap // 8) * 8)
    tile_rows = max(8, (min(int(tile_rows), tr_cap) // 8) * 8)

    if rows > tile_rows:
        tr = tile_rows
    else:
        # Everything fits in one tile: split in two so v7x's 2 TensorCores
        # both get a grid step (no-op on single-TC v5e/v6e).
        tr = (((rows + 1) // 2 + 7) // 8) * 8
        if tr >= rows or tr < 8:
            tr = rows                            # too small to split
    grid = (pl.cdiv(rows, tr),)

    out2d = pl.pallas_call(
        _pos_emb_kernel,
        out_shape=jax.ShapeDtypeStruct((rows, lanes), out_dtype),
        grid_spec=pltpu.PrefetchScalarGridSpec(
            num_scalar_prefetch=0,
            grid=grid,
            in_specs=[
                pl.BlockSpec((tr, k), lambda i: (i, 0)),
                pl.BlockSpec((k, lanes), lambda i: (0, 0)),   # resident freq table
                pl.BlockSpec((1, lanes), lambda i: (0, 0)),   # resident phase table
            ],
            out_specs=pl.BlockSpec((tr, lanes), lambda i: (i, 0)),
        ),
        compiler_params=pltpu.CompilerParams(
            dimension_semantics=("parallel",),        # shard token tiles over TCs
            vmem_limit_bytes=32 * 1024 * 1024,        # raise v5e's 16 MiB default
        ),
    )(x2d, w, phase)

    # (rows, k*C) is memory-identical to (I, J, C); reshape is free.
    return out2d.reshape(I, J, C)


def _reference(x, num_channels, max_positions=10000, endpoint=False):
    freqs = make_freqs(num_channels, max_positions, endpoint)
    t = jnp.einsum("ij,k->ijk", x, freqs)
    return jnp.concatenate([jnp.cos(t), jnp.sin(t)], axis=-1)


if __name__ == "__main__":
    key = jax.random.PRNGKey(0)
    k1, k2 = jax.random.split(key)

    # Small shape consistent with the module (timestep / noise-level per token).
    B, S, C = 2, 16, 32
    x = jax.random.uniform(k1, (B, S), dtype=jnp.float32) * 100.0
    out = jax.block_until_ready(positional_embedding(x, C))
    ref = _reference(x, C)
    assert out.shape == (B, S, C), out.shape
    # atol covers the sin(t + pi/2) == cos(t) rounding at |t| <= 100 (~6e-6).
    assert jnp.allclose(out, ref, atol=2e-4, rtol=1e-4), \
        float(jnp.max(jnp.abs(out - ref)))

    # Larger shape: exercises the multi-step pipelined grid and both-TC split.
    B2, S2 = 4, 2048
    x2 = jax.random.uniform(k2, (B2, S2), dtype=jnp.float32) * 100.0
    out2 = jax.block_until_ready(positional_embedding(x2, C))
    ref2 = _reference(x2, C)
    assert out2.shape == (B2, S2, C), out2.shape
    assert jnp.allclose(out2, ref2, atol=2e-4, rtol=1e-4), \
        float(jnp.max(jnp.abs(out2 - ref2)))

    print("KERNEL_OK")
</pallas_src>

<mosaic_0001>
module attributes {stable_mosaic.version = 11 : i64} {
  func.func @_pos_emb_kernel(%arg0: i32, %arg1: memref<8x4xf32, #tpu.memory_space<vmem>>, %arg2: memref<4x128xf32, #tpu.memory_space<vmem>>, %arg3: memref<1x128xf32, #tpu.memory_space<vmem>>, %arg4: memref<8x128xf32, #tpu.memory_space<vmem>>) attributes {dimension_semantics = [#tpu.dimension_semantics<parallel>], iteration_bounds = array<i64: 1>, scalar_prefetch = 0 : i64, scratch_operands = 0 : i64, tpu.core_type = #tpu.core_type<tc>, window_params = [{transform_indices = @transform_0, window_bounds = array<i64: 8, 4>}, {pipeline_mode = #tpu.pipeline_mode<synchronous>, transform_indices = @transform_1, window_bounds = array<i64: 4, 128>}, {pipeline_mode = #tpu.pipeline_mode<synchronous>, transform_indices = @transform_2, window_bounds = array<i64: 1, 128>}, {transform_indices = @transform_3, window_bounds = array<i64: 8, 128>}]} {
    %c0 = arith.constant 0 : index
    %c0_0 = arith.constant 0 : index
    %0 = vector.load %arg1[%c0, %c0_0] : memref<8x4xf32, #tpu.memory_space<vmem>>, vector<8x4xf32>
    %c0_1 = arith.constant 0 : index
    %c0_2 = arith.constant 0 : index
    %1 = vector.load %arg2[%c0_1, %c0_2] : memref<4x128xf32, #tpu.memory_space<vmem>>, vector<4x128xf32>
    %cst = arith.constant dense<0.000000e+00> : vector<8x128xf32>
    %2 = tpu.matmul %0, %1, %cst {dimension_numbers = #tpu.dot_dimension_numbers<[1], [0], [0], [1], [0, 0, 1, 1], [], []>, precision = #tpu.contract_precision<fp32>} : vector<8x4xf32>, vector<4x128xf32>, vector<8x128xf32> -> vector<8x128xf32>
    %c0_3 = arith.constant 0 : index
    %c0_4 = arith.constant 0 : index
    %3 = vector.load %arg3[%c0_3, %c0_4] : memref<1x128xf32, #tpu.memory_space<vmem>>, vector<1x128xf32>
    %4 = vector.broadcast %3 : vector<1x128xf32> to vector<8x128xf32>
    %5 = arith.addf %2, %4 : vector<8x128xf32>
    %6 = math.sin %5 : vector<8x128xf32>
    %c0_5 = arith.constant 0 : index
    %c0_6 = arith.constant 0 : index
    %7 = vector.load %arg4[%c0_5, %c0_6] : memref<8x128xf32, #tpu.memory_space<vmem>>, vector<8x128xf32>
    tpu.vector_store %arg4[%c0_5, %c0_6], %6 {strides = array<i32>} : memref<8x128xf32, #tpu.memory_space<vmem>>, vector<8x128xf32>,
    return
  }
  func.func @transform_0(%arg0: i32) -> (i32, i32) {
    %c0_i32 = arith.constant 0 : i32
    %c0_i32_0 = arith.constant 0 : i32
    return %arg0, %c0_i32 : i32, i32
  }
  func.func @transform_1(%arg0: i32) -> (i32, i32) {
    %c0_i32 = arith.constant 0 : i32
    %c0_i32_0 = arith.constant 0 : i32
    %c0_i32_1 = arith.constant 0 : i32
    return %c0_i32, %c0_i32_0 : i32, i32
  }
  func.func @transform_2(%arg0: i32) -> (i32, i32) {
    %c0_i32 = arith.constant 0 : i32
    %c0_i32_0 = arith.constant 0 : i32
    %c0_i32_1 = arith.constant 0 : i32
    return %c0_i32, %c0_i32_0 : i32, i32
  }
  func.func @transform_3(%arg0: i32) -> (i32, i32) {
    %c0_i32 = arith.constant 0 : i32
    %c0_i32_0 = arith.constant 0 : i32
    return %arg0, %c0_i32 : i32, i32
  }
}

</mosaic_0001>

<llo_original>
// kernel: tpu_custom_call.1
$region0: #{tpu_custom_call.1}
  #allocation0 [shape = 'u32[]', space=smem, size = 0x4, offset = 0x4, fixed_abs, tag = 'smem constant byte address 0x4 - core index']
  #allocation1 [shape = 'u32[144,128]{1,0:T(1,128)}', space=vmem, size = 0x12000, scoped, tag = 'internal scratch']
  %s0 = inlined_call_operand.vmem [shape: f32[8,4], index: 0, kind: input, shape index: {}]
  %s1 = inlined_call_operand.vmem [shape: f32[4,128], index: 1, kind: input, shape index: {}]
  %s2 = inlined_call_operand.vmem [shape: f32[1,128], index: 2, kind: input, shape index: {}]
  %s3 = inlined_call_operand.hbm [shape: f32[8,128], index: 3, kind: output, shape index: {}]
  %s4 = sld [smem:[#allocation0]]
  $region22: #{tpu_custom_call.1} parent=0
    _
  %s6 = ssub.s32 1, %s4
  %s7 = scalar_select 0, %s6, %s4
  $region1: #{tpu_custom_call.1} parent=0
    #allocation2 [shape = 'u8[4096]{0}', space=vmem, size = 0x1000, scoped, tag = 'output window, operand 0, single buffered']
    #allocation3 [shape = 's32[1]{0}', space=sflag, size = 0x4, scoped, tag = 'scoped memory for tpu_custom_call.1']
    %8 = vsyncpa [#allocation3], 0
    // Predicated region
    $region2: #{tpu_custom_call.1} parent=1 // pred_check
      _
    $region3: #{tpu_custom_call.1} parent=1 // pred_check_branch
      %10 = sbr.rel (0) target = $region5
    $region4: #{tpu_custom_call.1} parent=1 // pred_region
      _
    $region5: #{tpu_custom_call.1} parent=1 // pred_fallthru
      _
    // Predicated region
    $region6: #{tpu_custom_call.1} parent=1 // pred_check
      _
    $region7: #{tpu_custom_call.1} parent=1 // pred_check_branch
      %12 = sbr.rel (0) target = $region9
    $region8: #{tpu_custom_call.1} parent=1 // pred_region
      _
    $region9: #{tpu_custom_call.1} parent=1 // pred_fallthru
      _
    // Predicated region
    $region10: #{tpu_custom_call.1} parent=1 // pred_check
      _
    $region11: #{tpu_custom_call.1} parent=1 // pred_check_branch
      %14 = sbr.rel (0) target = $region13
    $region12: #{tpu_custom_call.1} parent=1 // pred_region
      _
    $region13: #{tpu_custom_call.1} parent=1 // pred_fallthru
      _
    %v15 = vld [vmem:[%s0] sm:$0xff]
    %v16 = vld [vmem:[%s1] sm:$0xf]
    %v17 = vld [vmem:[%s2] sm:$0x1]
    %v19 = vlaneseq
    %v20 = vshrl.u32 %v19, 7
    %v21 = vsub.s32 0, %v20
    %v22 = vrot.slane %v17, %v21
    %vm24 = vcmask 31744
    %v26 = vsel %vm24, %v15, 0
    %vm28 = vcmask 1043456
    %v30 = vsel %vm28, %v16, 0
    %32 = vmatprep.subr.mxu0 0.0
    %v33 = vand.u32 %v30, 4294901760
    %34 = vmatpush1.msra.mxu0 %v33
    %35 = vmatprep.subr.mxu0 0.0
    %36 = vmatpush1.msra.mxu0 0.0
    %37 = vmatprep.subr.mxu0 0.0
    %38 = vmatpush1.msra.mxu0 0.0
    %39 = vmatprep.subr.mxu0 0.0
    %40 = vmatpush1.msra.mxu0 0.0
    %41 = vmatprep.subr.mxu0 0.0
    %42 = vmatpush1.msra.mxu0 0.0
    %43 = vmatprep.subr.mxu0 0.0
    %44 = vmatpush1.msra.mxu0 0.0
    %45 = vmatprep.subr.mxu0 0.0
    %46 = vmatpush1.msra.mxu0 0.0
    %47 = vmatprep.subr.mxu0 0.0
    %48 = vmatpush1.msra.mxu0 0.0
    %49 = vmatprep.subr.mxu0 0.0
    %50 = vmatpush1.msra.mxu0 0.0
    %51 = vmatprep.subr.mxu0 0.0
    %52 = vmatpush1.msra.mxu0 0.0
    %53 = vmatprep.subr.mxu0 0.0
    %54 = vmatpush1.msra.mxu0 0.0
    %55 = vmatprep.subr.mxu0 0.0
    %56 = vmatpush1.msra.mxu0 0.0
    %57 = vmatprep.subr.mxu0 0.0
    %58 = vmatpush1.msra.mxu0 0.0
    %59 = vmatprep.subr.mxu0 0.0
    %60 = vmatpush1.msra.mxu0 0.0
    %61 = vmatprep.subr.mxu0 0.0
    %62 = vmatpush1.msra.mxu0 0.0
    %63 = vmatprep.subr.mxu0 0.0
    %64 = vmatpush1.msra.mxu0 0.0
    %65 = vmatprep.subr.mxu0 0.0
    %66 = vmatpush1.msra.mxu0 0.0
    %67 = vmatprep.subr.mxu0 0.0
    %68 = vmatpush1.msra.mxu0 0.0
    %69 = vmatprep.subr.mxu0 0.0
    %70 = vmatpush1.msra.mxu0 0.0
    %71 = vmatprep.subr.mxu0 0.0
    %72 = vmatpush1.msra.mxu0 0.0
    %73 = vmatprep.subr.mxu0 0.0
    %74 = vmatpush1.msra.mxu0 0.0
    %75 = vmatprep.subr.mxu0 0.0
    %76 = vmatpush1.msra.mxu0 0.0
    %77 = vmatprep.subr.mxu0 0.0
    %78 = vmatpush1.msra.mxu0 0.0
    %79 = vmatprep.subr.mxu0 0.0
    %80 = vmatpush1.msra.mxu0 0.0
    %81 = vmatprep.subr.mxu0 0.0
    %82 = vmatpush1.msra.mxu0 0.0
    %83 = vmatprep.subr.mxu0 0.0
    %84 = vmatpush1.msra.mxu0 0.0
    %85 = vmatprep.subr.mxu0 0.0
    %86 = vmatpush1.msra.mxu0 0.0
    %87 = vmatprep.subr.mxu0 0.0
    %88 = vmatpush1.msra.mxu0 0.0
    %89 = vmatprep.subr.mxu0 0.0
    %90 = vmatpush1.msra.mxu0 0.0
    %91 = vmatprep.subr.mxu0 0.0
    %92 = vmatpush1.msra.mxu0 0.0
    %93 = vmatprep.subr.mxu0 0.0
    %94 = vmatpush1.msra.mxu0 0.0
    %95 = vmatprep.subr.mxu0 0.0
    %96 = vmatpush1.msra.mxu0 0.0
    %97 = vmatprep.mubr.f32.mxu0 0.0
    %v98 = vand.u32 %v26, 4294901760
    %v99 = vsub.f32 %v26, %v98
    %v100 = vand.u32 %v99, 4294901760
    %v101 = vsub.f32 %v99, %v100
    %v102 = vand.u32 %v101, 4294901760
    %103 = vmatmul.mubr.f32.gmra.mrb[0].mxu0 %v102
    %v104 = vpop.f32.mrb[0].mxu0
    %v105 = vadd.f32 %v22, %v104
    %v106 = vpop.f32.mrb[0].mxu0
    %107 = vdwg.mxu0
    %108 = vmatprep.subr.mxu0 0.0
    %v109 = vand.u32 %v30, 4294901760
    %v110 = vsub.f32 %v30, %v109
    %v111 = vand.u32 %v110, 4294901760
    %v112 = vsub.f32 %v110, %v111
    %v113 = vand.u32 %v112, 4294901760
    %114 = vmatpush1.msra.mxu0 %v113
    %115 = vmatprep.subr.mxu0 0.0
    %116 = vmatpush1.msra.mxu0 0.0
    %117 = vmatprep.subr.mxu0 0.0
    %118 = vmatpush1.msra.mxu0 0.0
    %119 = vmatprep.subr.mxu0 0.0
    %120 = vmatpush1.msra.mxu0 0.0
    %121 = vmatprep.subr.mxu0 0.0
    %122 = vmatpush1.msra.mxu0 0.0
    %123 = vmatprep.subr.mxu0 0.0
    %124 = vmatpush1.msra.mxu0 0.0
    %125 = vmatprep.subr.mxu0 0.0
    %126 = vmatpush1.msra.mxu0 0.0
    %127 = vmatprep.subr.mxu0 0.0
    %128 = vmatpush1.msra.mxu0 0.0
    %129 = vmatprep.subr.mxu0 0.0
    %130 = vmatpush1.msra.mxu0 0.0
    %131 = vmatprep.subr.mxu0 0.0
    %132 = vmatpush1.msra.mxu0 0.0
    %133 = vmatprep.subr.mxu0 0.0
    %134 = vmatpush1.msra.mxu0 0.0
    %135 = vmatprep.subr.mxu0 0.0
    %136 = vmatpush1.msra.mxu0 0.0
    %137 = vmatprep.subr.mxu0 0.0
    %138 = vmatpush1.msra.mxu0 0.0
    %139 = vmatprep.subr.mxu0 0.0
    %140 = vmatpush1.msra.mxu0 0.0
    %141 = vmatprep.subr.mxu0 0.0
    %142 = vmatpush1.msra.mxu0 0.0
    %143 = vmatprep.subr.mxu0 0.0
    %144 = vmatpush1.msra.mxu0 0.0
    %145 = vmatprep.subr.mxu0 0.0
    %146 = vmatpush1.msra.mxu0 0.0
    %147 = vmatprep.subr.mxu0 0.0
    %148 = vmatpush1.msra.mxu0 0.0
    %149 = vmatprep.subr.mxu0 0.0
    %150 = vmatpush1.msra.mxu0 0.0
    %151 = vmatprep.subr.mxu0 0.0
    %152 = vmatpush1.msra.mxu0 0.0
    %153 = vmatprep.subr.mxu0 0.0
    %154 = vmatpush1.msra.mxu0 0.0
    %155 = vmatprep.subr.mxu0 0.0
    %156 = vmatpush1.msra.mxu0 0.0
    %157 = vmatprep.subr.mxu0 0.0
    %158 = vmatpush1.msra.mxu0 0.0
    %159 = vmatprep.subr.mxu0 0.0
    %160 = vmatpush1.msra.mxu0 0.0
    %161 = vmatprep.subr.mxu0 0.0
    %162 = vmatpush1.msra.mxu0 0.0
    %163 = vmatprep.subr.mxu0 0.0
    %164 = vmatpush1.msra.mxu0 0.0
    %165 = vmatprep.subr.mxu0 0.0
    %166 = vmatpush1.msra.mxu0 0.0
    %167 = vmatprep.subr.mxu0 0.0
    %168 = vmatpush1.msra.mxu0 0.0
    %169 = vmatprep.subr.mxu0 0.0
    %170 = vmatpush1.msra.mxu0 0.0
    %171 = vmatprep.subr.mxu0 0.0
    %172 = vmatpush1.msra.mxu0 0.0
    %173 = vmatprep.subr.mxu0 0.0
    %174 = vmatpush1.msra.mxu0 0.0
    %175 = vmatprep.subr.mxu0 0.0
    %176 = vmatpush1.msra.mxu0 0.0
    %177 = vmatprep.mubr.f32.mxu0 0.0
    %v178 = vand.u32 %v26, 4294901760
    %179 = vmatmul.mubr.f32.gmra.mrb[0].mxu0 %v178
    %v180 = vpop.f32.mrb[0].mxu0
    %v181 = vadd.f32 %v105, %v180
    %v182 = vpop.f32.mrb[0].mxu0
    %183 = vdwg.mxu0
    %184 = vmatprep.subr.mxu0 0.0
    %v185 = vand.u32 %v30, 4294901760
    %v186 = vsub.f32 %v30, %v185
    %187 = vmatpush1.msra.mxu0 %v186
    %188 = vmatprep.subr.mxu0 0.0
    %189 = vmatpush1.msra.mxu0 0.0
    %190 = vmatprep.subr.mxu0 0.0
    %191 = vmatpush1.msra.mxu0 0.0
    %192 = vmatprep.subr.mxu0 0.0
    %193 = vmatpush1.msra.mxu0 0.0
    %194 = vmatprep.subr.mxu0 0.0
    %195 = vmatpush1.msra.mxu0 0.0
    %196 = vmatprep.subr.mxu0 0.0
    %197 = vmatpush1.msra.mxu0 0.0
    %198 = vmatprep.subr.mxu0 0.0
    %199 = vmatpush1.msra.mxu0 0.0
    %200 = vmatprep.subr.mxu0 0.0
    %201 = vmatpush1.msra.mxu0 0.0
    %202 = vmatprep.subr.mxu0 0.0
    %203 = vmatpush1.msra.mxu0 0.0
    %204 = vmatprep.subr.mxu0 0.0
    %205 = vmatpush1.msra.mxu0 0.0
    %206 = vmatprep.subr.mxu0 0.0
    %207 = vmatpush1.msra.mxu0 0.0
    %208 = vmatprep.subr.mxu0 0.0
    %209 = vmatpush1.msra.mxu0 0.0
    %210 = vmatprep.subr.mxu0 0.0
    %211 = vmatpush1.msra.mxu0 0.0
    %212 = vmatprep.subr.mxu0 0.0
    %213 = vmatpush1.msra.mxu0 0.0
    %214 = vmatprep.subr.mxu0 0.0
    %215 = vmatpush1.msra.mxu0 0.0
    %216 = vmatprep.subr.mxu0 0.0
    %217 = vmatpush1.msra.mxu0 0.0
    %218 = vmatprep.subr.mxu0 0.0
    %219 = vmatpush1.msra.mxu0 0.0
    %220 = vmatprep.subr.mxu0 0.0
    %221 = vmatpush1.msra.mxu0 0.0
    %222 = vmatprep.subr.mxu0 0.0
    %223 = vmatpush1.msra.mxu0 0.0
    %224 = vmatprep.subr.mxu0 0.0
    %225 = vmatpush1.msra.mxu0 0.0
    %226 = vmatprep.subr.mxu0 0.0
    %227 = vmatpush1.msra.mxu0 0.0
    %228 = vmatprep.subr.mxu0 0.0
    %229 = vmatpush1.msra.mxu0 0.0
    %230 = vmatprep.subr.mxu0 0.0
    %231 = vmatpush1.msra.mxu0 0.0
    %232 = vmatprep.subr.mxu0 0.0
    %233 = vmatpush1.msra.mxu0 0.0
    %234 = vmatprep.subr.mxu0 0.0
    %235 = vmatpush1.msra.mxu0 0.0
    %236 = vmatprep.subr.mxu0 0.0
    %237 = vmatpush1.msra.mxu0 0.0
    %238 = vmatprep.subr.mxu0 0.0
    %239 = vmatpush1.msra.mxu0 0.0
    %240 = vmatprep.subr.mxu0 0.0
    %241 = vmatpush1.msra.mxu0 0.0
    %242 = vmatprep.subr.mxu0 0.0
    %243 = vmatpush1.msra.mxu0 0.0
    %244 = vmatprep.subr.mxu0 0.0
    %245 = vmatpush1.msra.mxu0 0.0
    %246 = vmatprep.subr.mxu0 0.0
    %247 = vmatpush1.msra.mxu0 0.0
    %248 = vmatprep.subr.mxu0 0.0
    %249 = vmatpush1.msra.mxu0 0.0
    %250 = vmatprep.mubr.f32.mxu0 0.0
    %v251 = vand.u32 %v26, 4294901760
    %v252 = vsub.f32 %v26, %v251
    %253 = vmatmul.mubr.f32.gmra.mrb[0].mxu0 %v252
    %v254 = vpop.f32.mrb[0].mxu0
    %v255 = vadd.f32 %v181, %v254
    %v256 = vpop.f32.mrb[0].mxu0
    %257 = vdwg.mxu0
    %258 = vmatprep.subr.mxu0 0.0
    %v259 = vand.u32 %v30, 4294901760
    %260 = vmatpush1.msra.mxu0 %v259
    %261 = vmatprep.subr.mxu0 0.0
    %262 = vmatpush1.msra.mxu0 0.0
    %263 = vmatprep.subr.mxu0 0.0
    %264 = vmatpush1.msra.mxu0 0.0
    %265 = vmatprep.subr.mxu0 0.0
    %266 = vmatpush1.msra.mxu0 0.0
    %267 = vmatprep.subr.mxu0 0.0
    %268 = vmatpush1.msra.mxu0 0.0
    %269 = vmatprep.subr.mxu0 0.0
    %270 = vmatpush1.msra.mxu0 0.0
    %271 = vmatprep.subr.mxu0 0.0
    %272 = vmatpush1.msra.mxu0 0.0
    %273 = vmatprep.subr.mxu0 0.0
    %274 = vmatpush1.msra.mxu0 0.0
    %275 = vmatprep.subr.mxu0 0.0
    %276 = vmatpush1.msra.mxu0 0.0
    %277 = vmatprep.subr.mxu0 0.0
    %278 = vmatpush1.msra.mxu0 0.0
    %279 = vmatprep.subr.mxu0 0.0
    %280 = vmatpush1.msra.mxu0 0.0
    %281 = vmatprep.subr.mxu0 0.0
    %282 = vmatpush1.msra.mxu0 0.0
    %283 = vmatprep.subr.mxu0 0.0
    %284 = vmatpush1.msra.mxu0 0.0
    %285 = vmatprep.subr.mxu0 0.0
    %286 = vmatpush1.msra.mxu0 0.0
    %287 = vmatprep.subr.mxu0 0.0
    %288 = vmatpush1.msra.mxu0 0.0
    %289 = vmatprep.subr.mxu0 0.0
    %290 = vmatpush1.msra.mxu0 0.0
    %291 = vmatprep.subr.mxu0 0.0
    %292 = vmatpush1.msra.mxu0 0.0
    %293 = vmatprep.subr.mxu0 0.0
    %294 = vmatpush1.msra.mxu0 0.0
    %295 = vmatprep.subr.mxu0 0.0
    %296 = vmatpush1.msra.mxu0 0.0
    %297 = vmatprep.subr.mxu0 0.0
    %298 = vmatpush1.msra.mxu0 0.0
    %299 = vmatprep.subr.mxu0 0.0
    %300 = vmatpush1.msra.mxu0 0.0
    %301 = vmatprep.subr.mxu0 0.0
    %302 = vmatpush1.msra.mxu0 0.0
    %303 = vmatprep.subr.mxu0 0.0
    %304 = vmatpush1.msra.mxu0 0.0
    %305 = vmatprep.subr.mxu0 0.0
    %306 = vmatpush1.msra.mxu0 0.0
    %307 = vmatprep.subr.mxu0 0.0
    %308 = vmatpush1.msra.mxu0 0.0
    %309 = vmatprep.subr.mxu0 0.0
    %310 = vmatpush1.msra.mxu0 0.0
    %311 = vmatprep.subr.mxu0 0.0
    %312 = vmatpush1.msra.mxu0 0.0
    %313 = vmatprep.subr.mxu0 0.0
    %314 = vmatpush1.msra.mxu0 0.0
    %315 = vmatprep.subr.mxu0 0.0
    %316 = vmatpush1.msra.mxu0 0.0
    %317 = vmatprep.subr.mxu0 0.0
    %318 = vmatpush1.msra.mxu0 0.0
    %319 = vmatprep.subr.mxu0 0.0
    %320 = vmatpush1.msra.mxu0 0.0
    %321 = vmatprep.subr.mxu0 0.0
    %322 = vmatpush1.msra.mxu0 0.0
    %323 = vmatprep.mubr.f32.mxu0 0.0
    %v324 = vand.u32 %v26, 4294901760
    %v325 = vsub.f32 %v26, %v324
    %v326 = vand.u32 %v325, 4294901760
    %327 = vmatmul.mubr.f32.gmra.mrb[0].mxu0 %v326
    %v328 = vpop.f32.mrb[0].mxu0
    %v329 = vadd.f32 %v255, %v328
    %v330 = vpop.f32.mrb[0].mxu0
    %331 = vdwg.mxu0
    %332 = vmatprep.subr.mxu0 0.0
    %v333 = vand.u32 %v30, 4294901760
    %v334 = vsub.f32 %v30, %v333
    %v335 = vand.u32 %v334, 4294901760
    %336 = vmatpush1.msra.mxu0 %v335
    %337 = vmatprep.subr.mxu0 0.0
    %338 = vmatpush1.msra.mxu0 0.0
    %339 = vmatprep.subr.mxu0 0.0
    %340 = vmatpush1.msra.mxu0 0.0
    %341 = vmatprep.subr.mxu0 0.0
    %342 = vmatpush1.msra.mxu0 0.0
    %343 = vmatprep.subr.mxu0 0.0
    %344 = vmatpush1.msra.mxu0 0.0
    %345 = vmatprep.subr.mxu0 0.0
    %346 = vmatpush1.msra.mxu0 0.0
    %347 = vmatprep.subr.mxu0 0.0
    %348 = vmatpush1.msra.mxu0 0.0
    %349 = vmatprep.subr.mxu0 0.0
    %350 = vmatpush1.msra.mxu0 0.0
    %351 = vmatprep.subr.mxu0 0.0
    %352 = vmatpush1.msra.mxu0 0.0
    %353 = vmatprep.subr.mxu0 0.0
    %354 = vmatpush1.msra.mxu0 0.0
    %355 = vmatprep.subr.mxu0 0.0
    %356 = vmatpush1.msra.mxu0 0.0
    %357 = vmatprep.subr.mxu0 0.0
    %358 = vmatpush1.msra.mxu0 0.0
    %359 = vmatprep.subr.mxu0 0.0
    %360 = vmatpush1.msra.mxu0 0.0
    %361 = vmatprep.subr.mxu0 0.0
    %362 = vmatpush1.msra.mxu0 0.0
    %363 = vmatprep.subr.mxu0 0.0
    %364 = vmatpush1.msra.mxu0 0.0
    %365 = vmatprep.subr.mxu0 0.0
    %366 = vmatpush1.msra.mxu0 0.0
    %367 = vmatprep.subr.mxu0 0.0
    %368 = vmatpush1.msra.mxu0 0.0
    %369 = vmatprep.subr.mxu0 0.0
    %370 = vmatpush1.msra.mxu0 0.0
    %371 = vmatprep.subr.mxu0 0.0
    %372 = vmatpush1.msra.mxu0 0.0
    %373 = vmatprep.subr.mxu0 0.0
    %374 = vmatpush1.msra.mxu0 0.0
    %375 = vmatprep.subr.mxu0 0.0
    %376 = vmatpush1.msra.mxu0 0.0
    %377 = vmatprep.subr.mxu0 0.0
    %378 = vmatpush1.msra.mxu0 0.0
    %379 = vmatprep.subr.mxu0 0.0
    %380 = vmatpush1.msra.mxu0 0.0
    %381 = vmatprep.subr.mxu0 0.0
    %382 = vmatpush1.msra.mxu0 0.0
    %383 = vmatprep.subr.mxu0 0.0
    %384 = vmatpush1.msra.mxu0 0.0
    %385 = vmatprep.subr.mxu0 0.0
    %386 = vmatpush1.msra.mxu0 0.0
    %387 = vmatprep.subr.mxu0 0.0
    %388 = vmatpush1.msra.mxu0 0.0
    %389 = vmatprep.subr.mxu0 0.0
    %390 = vmatpush1.msra.mxu0 0.0
    %391 = vmatprep.subr.mxu0 0.0
    %392 = vmatpush1.msra.mxu0 0.0
    %393 = vmatprep.subr.mxu0 0.0
    %394 = vmatpush1.msra.mxu0 0.0
    %395 = vmatprep.subr.mxu0 0.0
    %396 = vmatpush1.msra.mxu0 0.0
    %397 = vmatprep.subr.mxu0 0.0
    %398 = vmatpush1.msra.mxu0 0.0
    %399 = vmatprep.mubr.f32.mxu0 0.0
    %v400 = vand.u32 %v26, 4294901760
    %401 = vmatmul.mubr.f32.gmra.mrb[0].mxu0 %v400
    %v402 = vpop.f32.mrb[0].mxu0
    %v403 = vadd.f32 %v329, %v402
    %v404 = vpop.f32.mrb[0].mxu0
    %405 = vdwg.mxu0
    %406 = vmatprep.subr.mxu0 0.0
    %v407 = vand.u32 %v30, 4294901760
    %408 = vmatpush1.msra.mxu0 %v407
    %409 = vmatprep.subr.mxu0 0.0
    %410 = vmatpush1.msra.mxu0 0.0
    %411 = vmatprep.subr.mxu0 0.0
    %412 = vmatpush1.msra.mxu0 0.0
    %413 = vmatprep.subr.mxu0 0.0
    %414 = vmatpush1.msra.mxu0 0.0
    %415 = vmatprep.subr.mxu0 0.0
    %416 = vmatpush1.msra.mxu0 0.0
    %417 = vmatprep.subr.mxu0 0.0
    %418 = vmatpush1.msra.mxu0 0.0
    %419 = vmatprep.subr.mxu0 0.0
    %420 = vmatpush1.msra.mxu0 0.0
    %421 = vmatprep.subr.mxu0 0.0
    %422 = vmatpush1.msra.mxu0 0.0
    %423 = vmatprep.subr.mxu0 0.0
    %424 = vmatpush1.msra.mxu0 0.0
    %425 = vmatprep.subr.mxu0 0.0
    %426 = vmatpush1.msra.mxu0 0.0
    %427 = vmatprep.subr.mxu0 0.0
    %428 = vmatpush1.msra.mxu0 0.0
    %429 = vmatprep.subr.mxu0 0.0
    %430 = vmatpush1.msra.mxu0 0.0
    %431 = vmatprep.subr.mxu0 0.0
    %432 = vmatpush1.msra.mxu0 0.0
    %433 = vmatprep.subr.mxu0 0.0
    %434 = vmatpush1.msra.mxu0 0.0
    %435 = vmatprep.subr.mxu0 0.0
    %436 = vmatpush1.msra.mxu0 0.0
    %437 = vmatprep.subr.mxu0 0.0
    %438 = vmatpush1.msra.mxu0 0.0
    %439 = vmatprep.subr.mxu0 0.0
    %440 = vmatpush1.msra.mxu0 0.0
    %441 = vmatprep.subr.mxu0 0.0
    %442 = vmatpush1.msra.mxu0 0.0
    %443 = vmatprep.subr.mxu0 0.0
    %444 = vmatpush1.msra.mxu0 0.0
    %445 = vmatprep.subr.mxu0 0.0
    %446 = vmatpush1.msra.mxu0 0.0
    %447 = vmatprep.subr.mxu0 0.0
    %448 = vmatpush1.msra.mxu0 0.0
    %449 = vmatprep.subr.mxu0 0.0
    %450 = vmatpush1.msra.mxu0 0.0
    %451 = vmatprep.subr.mxu0 0.0
    %452 = vmatpush1.msra.mxu0 0.0
    %453 = vmatprep.subr.mxu0 0.0
    %454 = vmatpush1.msra.mxu0 0.0
    %455 = vmatprep.subr.mxu0 0.0
    %456 = vmatpush1.msra.mxu0 0.0
    %457 = vmatprep.subr.mxu0 0.0
    %458 = vmatpush1.msra.mxu0 0.0
    %459 = vmatprep.subr.mxu0 0.0
    %460 = vmatpush1.msra.mxu0 0.0
    %461 = vmatprep.subr.mxu0 0.0
    %462 = vmatpush1.msra.mxu0 0.0
    %463 = vmatprep.subr.mxu0 0.0
    %464 = vmatpush1.msra.mxu0 0.0
    %465 = vmatprep.subr.mxu0 0.0
    %466 = vmatpush1.msra.mxu0 0.0
    %467 = vmatprep.subr.mxu0 0.0
    %468 = vmatpush1.msra.mxu0 0.0
    %469 = vmatprep.subr.mxu0 0.0
    %470 = vmatpush1.msra.mxu0 0.0
    %471 = vmatprep.mubr.f32.mxu0 0.0
    %v472 = vand.u32 %v26, 4294901760
    %473 = vmatmul.mubr.f32.gmra.mrb[0].mxu0 %v472
    %v474 = vpop.f32.mrb[0].mxu0
    %v475 = vadd.f32 %v403, %v474
    %v476 = vpop.f32.mrb[0].mxu0
    %477 = vdwg.mxu0
    %v478 = vand.u32 2147483647, %v475
    %vm479 = vcmp.le.f32.partialorder %v478, 0.7853982
    %vm480 = vcmp.lt.s32.totalorder %v475, 0
    %v481 = vand.u32 %v475, 2139095040
    %v482 = vshrl.u32 %v481, 23
    %v483 = vsub.s32 %v482, 127
    %v484 = vand.u32 2147483647, %v475
    %v485 = vand.u32 %v484, 8388607
    %v486 = vor.u32 %v485, 8388608
    %v487 = vsub.s32 0, %v486
    %v488 = vadd.s32 %v483, 1
    %vm489 = vcmp.gt.s32.totalorder %v488, 0
    %v490 = vsel %vm489, %v488, 0
    %v491 = vshrl.u32 %v490, 5
    %v492 = vand.u32 %v490, 31
    %v493 = vsub.s32 32, %v492
    %v494 = vshrl.u32 683565275, %v493
    %v495 = vshll.u32 683565275, %v492
    %v496 = vshrl.u32 2475754826, %v493
    %v497 = vor.u32 %v495, %v496
    %v498 = vshll.u32 2475754826, %v492
    %v499 = vshrl.u32 2131351028, %v493
    %v500 = vor.u32 %v498, %v499
    %v501 = vshll.u32 2131351028, %v492
    %v502 = vshrl.u32 2102212464, %v493
    %v503 = vor.u32 %v501, %v502
    %v504 = vshll.u32 2102212464, %v492
    %v505 = vshrl.u32 920167782, %v493
    %v506 = vor.u32 %v504, %v505
    %v507 = vshll.u32 920167782, %v492
    %v508 = vshrl.u32 1326507024, %v493
    %v509 = vor.u32 %v507, %v508
    %vm510 = vcmp.lt.s32.totalorder %v491, 1
    %vm511 = vcmp.lt.s32.totalorder %v491, 2
    %vm512 = vcmp.lt.s32.totalorder %v491, 3
    %vm513 = vcmp.lt.s32.totalorder %v491, 4
    %v514 = vsel %vm510, %v494, %v497
    %v515 = vsel %vm513, %v503, 2102212464
    %v516 = vsel %vm512, %v500, %v515
    %v517 = vsel %vm511, %v514, %v516
    %v518 = vsel %vm510, %v497, %v500
    %v519 = vsel %vm513, %v506, 920167782
    %v520 = vsel %vm512, %v503, %v519
    %v521 = vsel %vm511, %v518, %v520
    %v522 = vsel %vm510, %v500, %v503
    %v523 = vsel %vm513, %v509, 1326507024
    %v524 = vsel %vm512, %v506, %v523
    %v525 = vsel %vm511, %v522, %v524
    %v526 = vshll.u32 %v486, 8
    %v527 = vmul.u32.u64.compose %v526, %v525
    %v528 = vextract.low.u32 %v527
    %v529 = vextract.high.u32 %v527
    %v530 = vmul.u32.u64.compose %v526, %v521
    %v531 = vextract.low.u32 %v530
    %v532 = vextract.high.u32 %v530
    %v533 = vmul.u32 %v526, %v517
    %v534 = vadd.s32 %v529, %v531
    %vm535 = vc.u32 %v529, %v531
    %v536 = vadd.s32 %v532, 1
    %v537 = vsel %vm535, %v536, %v532
    %v538 = vadd.s32 %v533, %v537
    %v539 = vadd.s32 %v538, 536870912
    %v540 = vshrl.u32 %v539, 30
    %v541 = vshll.u32 %v540, 30
    %v542 = vsub.s32 %v538, %v541
    %vm543 = vcmp.lt.s32.totalorder %v542, 0
    %v544 = vsub.s32 0, %v542
    %v545 = vsel %vm543, %v544, %v542
    %v546 = vclz %v545
    %v547 = vsub.s32 %v546, 2
    %vm548 = vcmp.gt.s32.totalorder 0, %v547
    %v549 = vsel %vm548, 0, %v547
    %v550 = vsub.s32 32, %v549
    %v551 = vshll.u32 %v542, %v549
    %v552 = vshrl.u32 %v534, %v550
    %v553 = vor.u32 %v551, %v552
    %v554 = vsub.s32 4294967266, %v549
    %v555 = vadd.s32 %v554, 127
    %v556 = vshll.u32 %v555, 23
    %v557 = vor.u32 4788187, %v556
    %v558 = vand.u32 2147483647, %v557
    %v560 = vcvt.s32.f32 %v553
    %v561 = vmul.f32 %v560, %v558
    %v562 = vxor.u32 %v561, 2147483648
    %v563 = vsel %vm480, %v562, %v561
    %v564 = vsub.s32 4, %v540
    %v565 = vsel %vm480, %v564, %v540
    %v566 = vsel %vm479, %v475, %v563
    %v567 = vsel %vm479, 0, %v565
    %v568 = vcosq.f32.pop %v566
    %v569 = vsinq.f32.pop %v566
    %vm570 = vweird.f32 %v475
    %v571 = vadd.s32 %v567, 3
    %v572 = vand.u32 %v571, 3
    %vm573 = vcmp.lt.s32.totalorder %v572, 2
    %vm574 = vcmp.eq.s32.totalorder %v572, 0
    %v575 = vxor.u32 %v569, 2147483648
    %v576 = vsel %vm574, %v568, %v575
    %vm577 = vcmp.eq.s32.totalorder %v572, 2
    %v578 = vxor.u32 %v568, 2147483648
    %v579 = vsel %vm577, %v578, %v569
    %v580 = vsel %vm573, %v576, %v579
    %v581 = vsel %vm570, nan, %v580
    %582 = vst [vmem:[#allocation2] sm:$0xff] %v581
    // Predicated region
    $region14: #{tpu_custom_call.1} parent=1 // pred_check
      _
    $region15: #{tpu_custom_call.1} parent=1 // pred_check_branch
      %584 = sbr.rel (0) target = $region17
    $region16: #{tpu_custom_call.1} parent=1 // pred_region
      %s586 = ssub.s32 128, 128
      %587 = vsyncadd [#allocation3], %s586
      %s589 = sshll.u32 [#allocation2], 4
      %s590 = int_to_ptr.vmem [resolvable:$true] %s589
      %592 = dma.vmem_to_hbm [thread:$0]  %s590, 128, %s3, [#allocation3]
    $region17: #{tpu_custom_call.1} parent=1 // pred_fallthru
      _
    // Predicated region
    $region18: #{tpu_custom_call.1} parent=1 // pred_check
      _
    $region19: #{tpu_custom_call.1} parent=1 // pred_check_branch
      %594 = sbr.rel (0) target = $region21
    $region20: #{tpu_custom_call.1} parent=1 // pred_region
      %595 = dma.done [#allocation3], 128
    $region21: #{tpu_custom_call.1} parent=1 // pred_fallthru
      _
    %596 = vsyncpa [#allocation3], 1

</llo_original>
